<compile_context>
chip_gen: v7x
topology: tpu7x:2x2x1
jax: 0.10.0
libtpu: 0.0.40
codegen_flags: <defaults>
</compile_context>

<pallas_src>
import functools
import math

import jax
import jax.numpy as jnp
from jax.experimental import pallas as pl
from jax.experimental.pallas import tpu as pltpu


def _round_up(v, m):
    return (v + m - 1) // m * m


def _keep_mask(shape, row_offset_u32, seed):
    """Bernoulli(0.5) keep-mask via a counter-based integer hash.

    Pure jnp uint32 ops (2-D iota + xorshift/multiply mixing), so it lowers on
    the TPU Mosaic backend and in interpret mode alike.  Keyed on the *global*
    row index so every grid tile draws an independent mask.
    """
    r = jax.lax.broadcasted_iota(jnp.uint32, shape, 0) + row_offset_u32
    c = jax.lax.broadcasted_iota(jnp.uint32, shape, 1)
    h = (r * jnp.uint32(0x9E3779B1)) ^ (c * jnp.uint32(0x85EBCA77)) ^ jnp.uint32(seed)
    h = h ^ (h >> 15)
    h = h * jnp.uint32(0x2C1B3C6D)
    h = h ^ (h >> 12)
    h = h * jnp.uint32(0x297A2D39)
    h = h ^ (h >> 15)
    return (h >> 31) == 0  # top bit -> keep with probability 1/2


def _prenet_fused_kernel(x_ref, w1_ref, w2_ref, o_ref, *, tile_m, seed1, seed2):
    """Fused: o = drop(relu(drop(relu(x@W1)) @ W2)) on a (tile_m, Np) tile."""
    i = pl.program_id(0)
    row0 = (i * tile_m).astype(jnp.uint32)  # global row offset of this tile

    # ---- layer 1: Linear(no bias) -> ReLU -> Dropout(0.5) (inverted) -------
    h = jnp.dot(x_ref[...], w1_ref[...], preferred_element_type=jnp.float32)
    h = jnp.maximum(h, 0.0)
    keep1 = _keep_mask(h.shape, row0, seed1)
    h = jnp.where(keep1, h * 2.0, 0.0)

    # ---- layer 2 (intermediate h stays on-chip; re-cast to bf16 for MXU) ---
    y = jnp.dot(h.astype(w2_ref.dtype), w2_ref[...],
                preferred_element_type=jnp.float32)
    y = jnp.maximum(y, 0.0)
    keep2 = _keep_mask(y.shape, row0, seed2)
    y = jnp.where(keep2, y * 2.0, 0.0)

    o_ref[...] = y.astype(o_ref.dtype)


def prenet_forward(x, w1, w2, *, seed=0, tile_m=512):
    """Prenet forward.

    x  : (B, T, n_mel) float32
    w1 : (n_mel, d_model) float32   (y = x @ w1, i.e. PyTorch weight.T)
    w2 : (d_model, d_model) float32
    returns (B, T, d_model) float32
    """
    B, T, n_mel = x.shape
    assert w1.shape[0] == n_mel
    d_model = w1.shape[1]
    assert w2.shape == (d_model, d_model)

    M = B * T
    Kp = _round_up(n_mel, 128)        # lane-aligned input width
    Np = _round_up(d_model, 128)      # lane-dense output width
    tm = min(tile_m, _round_up(M, 8)) # row tile (sublane-aligned)
    Mp = _round_up(M, tm)             # pad rows so grid divides evenly

    # Zero padding keeps the un-padded region numerically exact:
    # padded cols of W1/W2 and padded rows of x contribute only zeros.
    x2d = x.reshape(M, n_mel).astype(jnp.bfloat16)
    x_p = jnp.zeros((Mp, Kp), jnp.bfloat16).at[:M, :n_mel].set(x2d)
    w1_p = jnp.zeros((Kp, Np), jnp.bfloat16).at[:n_mel, :d_model].set(
        w1.astype(jnp.bfloat16))
    w2_p = jnp.zeros((Np, Np), jnp.bfloat16).at[:d_model, :d_model].set(
        w2.astype(jnp.bfloat16))

    # Per-layer seeds mixed so layers never reuse masks.
    seed1 = (seed * 2654435761 + 0x00000001) & 0xFFFFFFFF
    seed2 = (seed * 2654435761 + 0x9E3779B9) & 0xFFFFFFFF

    kernel = functools.partial(
        _prenet_fused_kernel, tile_m=tm, seed1=seed1, seed2=seed2)

    out = pl.pallas_call(
        kernel,
        out_shape=jax.ShapeDtypeStruct((Mp, Np), jnp.float32),
        grid=(Mp // tm,),
        in_specs=[
            pl.BlockSpec((tm, Kp), lambda i: (i, 0)),   # x row-tile (streamed)
            pl.BlockSpec((Kp, Np), lambda i: (0, 0)),   # W1 (VMEM-resident)
            pl.BlockSpec((Np, Np), lambda i: (0, 0)),   # W2 (VMEM-resident)
        ],
        out_specs=pl.BlockSpec((tm, Np), lambda i: (i, 0)),
        compiler_params=pltpu.CompilerParams(
            dimension_semantics=("parallel",),          # tiles independent
        ),
    )(x_p, w1_p, w2_p)

    return out[:M, :d_model].reshape(B, T, d_model)


def xavier_uniform(key, in_dim, out_dim, gain=1.0):
    """Matches nn.init.xavier_uniform_ (gain('linear') == 1.0)."""
    bound = gain * math.sqrt(6.0 / (in_dim + out_dim))
    return jax.random.uniform(
        key, (in_dim, out_dim), dtype=jnp.float32, minval=-bound, maxval=bound
    )


if __name__ == "__main__":
    # Small shapes consistent with Prenet(n_mel_channels, d_model)
    B, T = 2, 8
    n_mel_channels = 32
    d_model = 32

    key = jax.random.PRNGKey(0)
    kx, kw1, kw2 = jax.random.split(key, 3)

    x = jax.random.normal(kx, (B, T, n_mel_channels), dtype=jnp.float32)
    w1 = xavier_uniform(kw1, n_mel_channels, d_model)  # linear1 (bias=False)
    w2 = xavier_uniform(kw2, d_model, d_model)         # linear2 (bias=False)

    out = prenet_forward(x, w1, w2, seed=0)
    out = jax.block_until_ready(out)

    assert out.shape == (B, T, d_model)
    assert out.dtype == jnp.float32
    # Sanity: ReLU + dropout(0.5) should zero out roughly ~3/4 of activations.
    zero_frac = float(jnp.mean((out == 0.0).astype(jnp.float32)))
    assert 0.3 < zero_frac < 0.95, zero_frac
    print("KERNEL_OK")
</pallas_src>

<mosaic_0001>
module attributes {stable_mosaic.version = 11 : i64} {
  func.func @_prenet_fused_kernel(%arg0: i32, %arg1: memref<16x128xbf16, #tpu.memory_space<vmem>>, %arg2: memref<128x128xbf16, #tpu.memory_space<vmem>>, %arg3: memref<128x128xbf16, #tpu.memory_space<vmem>>, %arg4: memref<16x128xf32, #tpu.memory_space<vmem>>) attributes {dimension_semantics = [#tpu.dimension_semantics<parallel>], iteration_bounds = array<i64: 1>, scalar_prefetch = 0 : i64, scratch_operands = 0 : i64, tpu.core_type = #tpu.core_type<tc>, window_params = [{transform_indices = @transform_0, window_bounds = array<i64: 16, 128>}, {pipeline_mode = #tpu.pipeline_mode<synchronous>, transform_indices = @transform_1, window_bounds = array<i64: 128, 128>}, {pipeline_mode = #tpu.pipeline_mode<synchronous>, transform_indices = @transform_2, window_bounds = array<i64: 128, 128>}, {transform_indices = @transform_3, window_bounds = array<i64: 16, 128>}]} {
    %c16_i32 = arith.constant 16 : i32
    %0 = arith.muli %arg0, %c16_i32 : i32
    %c0 = arith.constant 0 : index
    %c0_0 = arith.constant 0 : index
    %1 = vector.load %arg1[%c0, %c0_0] : memref<16x128xbf16, #tpu.memory_space<vmem>>, vector<16x128xbf16>
    %c0_1 = arith.constant 0 : index
    %c0_2 = arith.constant 0 : index
    %2 = vector.load %arg2[%c0_1, %c0_2] : memref<128x128xbf16, #tpu.memory_space<vmem>>, vector<128x128xbf16>
    %cst = arith.constant dense<0.000000e+00> : vector<16x128xf32>
    %3 = tpu.matmul %1, %2, %cst {dimension_numbers = #tpu.dot_dimension_numbers<[1], [0], [0], [1], [0, 0, 1, 1], [], []>} : vector<16x128xbf16>, vector<128x128xbf16>, vector<16x128xf32> -> vector<16x128xf32>
    %cst_3 = arith.constant 0.000000e+00 : f32
    %4 = vector.broadcast %cst_3 : f32 to vector<16x128xf32>
    %5 = arith.maximumf %3, %4 : vector<16x128xf32>
    %6 = tpu.iota {dimensions = array<i32: 0>} : vector<16x128xi32>
    %7 = vector.broadcast %0 : i32 to vector<16x128xi32>
    %8 = arith.addi %6, %7 : vector<16x128xi32>
    %9 = tpu.iota {dimensions = array<i32: 1>} : vector<16x128xi32>
    %c-1640531535_i32 = arith.constant -1640531535 : i32
    %10 = vector.broadcast %c-1640531535_i32 : i32 to vector<16x128xi32>
    %11 = arith.muli %8, %10 : vector<16x128xi32>
    %c-2048144777_i32 = arith.constant -2048144777 : i32
    %12 = vector.broadcast %c-2048144777_i32 : i32 to vector<16x128xi32>
    %13 = arith.muli %9, %12 : vector<16x128xi32>
    %14 = arith.xori %11, %13 : vector<16x128xi32>
    %c1_i32 = arith.constant 1 : i32
    %15 = vector.broadcast %c1_i32 : i32 to vector<16x128xi32>
    %16 = arith.xori %14, %15 : vector<16x128xi32>
    %c15_i32 = arith.constant 15 : i32
    %17 = vector.broadcast %c15_i32 : i32 to vector<16x128xi32>
    %18 = arith.shrui %16, %17 : vector<16x128xi32>
    %19 = arith.xori %16, %18 : vector<16x128xi32>
    %c739982445_i32 = arith.constant 739982445 : i32
    %20 = vector.broadcast %c739982445_i32 : i32 to vector<16x128xi32>
    %21 = arith.muli %19, %20 : vector<16x128xi32>
    %c12_i32 = arith.constant 12 : i32
    %22 = vector.broadcast %c12_i32 : i32 to vector<16x128xi32>
    %23 = arith.shrui %21, %22 : vector<16x128xi32>
    %24 = arith.xori %21, %23 : vector<16x128xi32>
    %c695872825_i32 = arith.constant 695872825 : i32
    %25 = vector.broadcast %c695872825_i32 : i32 to vector<16x128xi32>
    %26 = arith.muli %24, %25 : vector<16x128xi32>
    %c15_i32_4 = arith.constant 15 : i32
    %27 = vector.broadcast %c15_i32_4 : i32 to vector<16x128xi32>
    %28 = arith.shrui %26, %27 : vector<16x128xi32>
    %29 = arith.xori %26, %28 : vector<16x128xi32>
    %c31_i32 = arith.constant 31 : i32
    %30 = vector.broadcast %c31_i32 : i32 to vector<16x128xi32>
    %31 = arith.shrui %29, %30 : vector<16x128xi32>
    %c0_i32 = arith.constant 0 : i32
    %32 = vector.broadcast %c0_i32 : i32 to vector<16x128xi32>
    %33 = arith.cmpi eq, %31, %32 : vector<16x128xi32>
    %cst_5 = arith.constant 2.000000e+00 : f32
    %34 = vector.broadcast %cst_5 : f32 to vector<16x128xf32>
    %35 = arith.mulf %5, %34 : vector<16x128xf32>
    %cst_6 = arith.constant 0.000000e+00 : f32
    %36 = vector.broadcast %cst_6 : f32 to vector<16x128xf32>
    %37 = arith.select %33, %35, %36 : vector<16x128xi1>, vector<16x128xf32>
    %38 = arith.truncf %37 : vector<16x128xf32> to vector<16x128xbf16>
    %c0_7 = arith.constant 0 : index
    %c0_8 = arith.constant 0 : index
    %39 = vector.load %arg3[%c0_7, %c0_8] : memref<128x128xbf16, #tpu.memory_space<vmem>>, vector<128x128xbf16>
    %cst_9 = arith.constant dense<0.000000e+00> : vector<16x128xf32>
    %40 = tpu.matmul %38, %39, %cst_9 {dimension_numbers = #tpu.dot_dimension_numbers<[1], [0], [0], [1], [0, 0, 1, 1], [], []>} : vector<16x128xbf16>, vector<128x128xbf16>, vector<16x128xf32> -> vector<16x128xf32>
    %cst_10 = arith.constant 0.000000e+00 : f32
    %41 = vector.broadcast %cst_10 : f32 to vector<16x128xf32>
    %42 = arith.maximumf %40, %41 : vector<16x128xf32>
    %43 = tpu.iota {dimensions = array<i32: 0>} : vector<16x128xi32>
    %44 = vector.broadcast %0 : i32 to vector<16x128xi32>
    %45 = arith.addi %43, %44 : vector<16x128xi32>
    %46 = tpu.iota {dimensions = array<i32: 1>} : vector<16x128xi32>
    %c-1640531535_i32_11 = arith.constant -1640531535 : i32
    %47 = vector.broadcast %c-1640531535_i32_11 : i32 to vector<16x128xi32>
    %48 = arith.muli %45, %47 : vector<16x128xi32>
    %c-2048144777_i32_12 = arith.constant -2048144777 : i32
    %49 = vector.broadcast %c-2048144777_i32_12 : i32 to vector<16x128xi32>
    %50 = arith.muli %46, %49 : vector<16x128xi32>
    %51 = arith.xori %48, %50 : vector<16x128xi32>
    %c-1640531527_i32 = arith.constant -1640531527 : i32
    %52 = vector.broadcast %c-1640531527_i32 : i32 to vector<16x128xi32>
    %53 = arith.xori %51, %52 : vector<16x128xi32>
    %c15_i32_13 = arith.constant 15 : i32
    %54 = vector.broadcast %c15_i32_13 : i32 to vector<16x128xi32>
    %55 = arith.shrui %53, %54 : vector<16x128xi32>
    %56 = arith.xori %53, %55 : vector<16x128xi32>
    %c739982445_i32_14 = arith.constant 739982445 : i32
    %57 = vector.broadcast %c739982445_i32_14 : i32 to vector<16x128xi32>
    %58 = arith.muli %56, %57 : vector<16x128xi32>
    %c12_i32_15 = arith.constant 12 : i32
    %59 = vector.broadcast %c12_i32_15 : i32 to vector<16x128xi32>
    %60 = arith.shrui %58, %59 : vector<16x128xi32>
    %61 = arith.xori %58, %60 : vector<16x128xi32>
    %c695872825_i32_16 = arith.constant 695872825 : i32
    %62 = vector.broadcast %c695872825_i32_16 : i32 to vector<16x128xi32>
    %63 = arith.muli %61, %62 : vector<16x128xi32>
    %c15_i32_17 = arith.constant 15 : i32
    %64 = vector.broadcast %c15_i32_17 : i32 to vector<16x128xi32>
    %65 = arith.shrui %63, %64 : vector<16x128xi32>
    %66 = arith.xori %63, %65 : vector<16x128xi32>
    %c31_i32_18 = arith.constant 31 : i32
    %67 = vector.broadcast %c31_i32_18 : i32 to vector<16x128xi32>
    %68 = arith.shrui %66, %67 : vector<16x128xi32>
    %c0_i32_19 = arith.constant 0 : i32
    %69 = vector.broadcast %c0_i32_19 : i32 to vector<16x128xi32>
    %70 = arith.cmpi eq, %68, %69 : vector<16x128xi32>
    %cst_20 = arith.constant 2.000000e+00 : f32
    %71 = vector.broadcast %cst_20 : f32 to vector<16x128xf32>
    %72 = arith.mulf %42, %71 : vector<16x128xf32>
    %cst_21 = arith.constant 0.000000e+00 : f32
    %73 = vector.broadcast %cst_21 : f32 to vector<16x128xf32>
    %74 = arith.select %70, %72, %73 : vector<16x128xi1>, vector<16x128xf32>
    %c0_22 = arith.constant 0 : index
    %c0_23 = arith.constant 0 : index
    %75 = vector.load %arg4[%c0_22, %c0_23] : memref<16x128xf32, #tpu.memory_space<vmem>>, vector<16x128xf32>
    tpu.vector_store %arg4[%c0_22, %c0_23], %74 {strides = array<i32>} : memref<16x128xf32, #tpu.memory_space<vmem>>, vector<16x128xf32>,
    return
  }
  func.func @transform_0(%arg0: i32) -> (i32, i32) {
    %c0_i32 = arith.constant 0 : i32
    %c0_i32_0 = arith.constant 0 : i32
    return %arg0, %c0_i32 : i32, i32
  }
  func.func @transform_1(%arg0: i32) -> (i32, i32) {
    %c0_i32 = arith.constant 0 : i32
    %c0_i32_0 = arith.constant 0 : i32
    %c0_i32_1 = arith.constant 0 : i32
    return %c0_i32, %c0_i32_0 : i32, i32
  }
  func.func @transform_2(%arg0: i32) -> (i32, i32) {
    %c0_i32 = arith.constant 0 : i32
    %c0_i32_0 = arith.constant 0 : i32
    %c0_i32_1 = arith.constant 0 : i32
    return %c0_i32, %c0_i32_0 : i32, i32
  }
  func.func @transform_3(%arg0: i32) -> (i32, i32) {
    %c0_i32 = arith.constant 0 : i32
    %c0_i32_0 = arith.constant 0 : i32
    return %arg0, %c0_i32 : i32, i32
  }
}

</mosaic_0001>

<llo_original>
// kernel: tpu_custom_call.1
$region0: #{tpu_custom_call.1}
  #allocation0 [shape = 'u32[]', space=smem, size = 0x4, offset = 0x4, fixed_abs, tag = 'smem constant byte address 0x4 - core index']
  #allocation1 [shape = 'u32[144,128]{1,0:T(1,128)}', space=vmem, size = 0x12000, scoped, tag = 'internal scratch']
  %s0 = inlined_call_operand.hbm [shape: bf16[16,128], index: 0, kind: input, shape index: {}]
  %s1 = inlined_call_operand.hbm [shape: bf16[128,128], index: 1, kind: input, shape index: {}]
  %s2 = inlined_call_operand.hbm [shape: bf16[128,128], index: 2, kind: input, shape index: {}]
  %s3 = inlined_call_operand.hbm [shape: f32[16,128], index: 3, kind: output, shape index: {}]
  %s4 = sld [smem:[#allocation0]]
  $region34: #{tpu_custom_call.1} parent=0
    _
  %s6 = ssub.s32 1, %s4
  %s7 = scalar_select 0, %s6, %s4
  $region1: #{tpu_custom_call.1} parent=0
    #allocation2 [shape = 'u8[4096]{0}', space=vmem, size = 0x1000, scoped, tag = 'input window, operand 0, single buffered']
    #allocation3 [shape = 's32[1]{0}', space=sflag, size = 0x4, scoped, tag = 'scoped memory for tpu_custom_call.1']
    #allocation4 [shape = 's32[1]{0}', space=sflag, size = 0x4, scoped, tag = 'scoped memory for tpu_custom_call.1']
    #allocation5 [shape = 'u8[32768]{0}', space=vmem, size = 0x8000, scoped, tag = 'input window, operand 1, single buffered']
    #allocation6 [shape = 's32[1]{0}', space=sflag, size = 0x4, scoped, tag = 'scoped memory for tpu_custom_call.1']
    #allocation7 [shape = 'u8[32768]{0}', space=vmem, size = 0x8000, scoped, tag = 'input window, operand 2, single buffered']
    #allocation8 [shape = 'u8[8192]{0}', space=vmem, size = 0x2000, scoped, tag = 'output window, operand 0, single buffered']
    %8 = vsyncpa [#allocation3], 0
    %9 = vsyncpa [#allocation6], 0
    %10 = vsyncpa [#allocation4], 0
    // Predicated region
    $region2: #{tpu_custom_call.1} parent=1 // pred_check
      _
    $region3: #{tpu_custom_call.1} parent=1 // pred_check_branch
      %12 = sbr.rel (0) target = $region5
    $region4: #{tpu_custom_call.1} parent=1 // pred_region
      %s14 = ssub.s32 128, 128
      %15 = vsyncadd [#allocation3], %s14
      %s16 = sshll.u32 [#allocation2], 4
      %s17 = int_to_ptr.vmem [resolvable:$true] %s16
      %22 = dma.hbm_to_vmem [thread:$0]  %s0, 128, %s17, [#allocation3], 64, 64, 4
    $region5: #{tpu_custom_call.1} parent=1 // pred_fallthru
      _
    // Predicated region
    $region6: #{tpu_custom_call.1} parent=1 // pred_check
      _
    $region7: #{tpu_custom_call.1} parent=1 // pred_check_branch
      %24 = sbr.rel (0) target = $region9
    $region8: #{tpu_custom_call.1} parent=1 // pred_region
      %s26 = ssub.s32 1024, 1024
      %27 = vsyncadd [#allocation6], %s26
      %s28 = sshll.u32 [#allocation5], 4
      %s29 = int_to_ptr.vmem [resolvable:$true] %s28
      %34 = dma.hbm_to_vmem [thread:$0]  %s1, 1024, %s29, [#allocation6], 64, 64, 4
    $region9: #{tpu_custom_call.1} parent=1 // pred_fallthru
      _
    // Predicated region
    $region10: #{tpu_custom_call.1} parent=1 // pred_check
      _
    $region11: #{tpu_custom_call.1} parent=1 // pred_check_branch
      %36 = sbr.rel (0) target = $region13
    $region12: #{tpu_custom_call.1} parent=1 // pred_region
      %s38 = ssub.s32 1024, 1024
      %39 = vsyncadd [#allocation6], %s38
      %s40 = sshll.u32 [#allocation7], 4
      %s41 = int_to_ptr.vmem [resolvable:$true] %s40
      %46 = dma.hbm_to_vmem [thread:$0]  %s2, 1024, %s41, [#allocation6], 64, 64, 4
    $region13: #{tpu_custom_call.1} parent=1 // pred_fallthru
      _
    // Predicated region
    $region14: #{tpu_custom_call.1} parent=1 // pred_check
      _
    $region15: #{tpu_custom_call.1} parent=1 // pred_check_branch
      %48 = sbr.rel (0) target = $region17
    $region16: #{tpu_custom_call.1} parent=1 // pred_region
      %49 = dma.done [#allocation3], 128
    $region17: #{tpu_custom_call.1} parent=1 // pred_fallthru
      _
    // Predicated region
    $region18: #{tpu_custom_call.1} parent=1 // pred_check
      _
    $region19: #{tpu_custom_call.1} parent=1 // pred_check_branch
      %51 = sbr.rel (0) target = $region21
    $region20: #{tpu_custom_call.1} parent=1 // pred_region
      %52 = dma.done [#allocation6], 1024
    $region21: #{tpu_custom_call.1} parent=1 // pred_fallthru
      _
    // Predicated region
    $region22: #{tpu_custom_call.1} parent=1 // pred_check
      _
    $region23: #{tpu_custom_call.1} parent=1 // pred_check_branch
      %54 = sbr.rel (0) target = $region25
    $region24: #{tpu_custom_call.1} parent=1 // pred_region
      %55 = dma.done [#allocation6], 1024
    $region25: #{tpu_custom_call.1} parent=1 // pred_fallthru
      _
    %s57 = smul.u32 0, 16
    %v58 = vld [vmem:[#allocation2] sm:$0xf]
    %v59 = vld [vmem:[#allocation2 + $0x4] sm:$0xf]
    %v60 = vld [vmem:[#allocation5] sm:$0xf]
    %v61 = vld [vmem:[#allocation5 + $0x4] sm:$0xf]
    %v62 = vld [vmem:[#allocation5 + $0x8] sm:$0xf]
    %v63 = vld [vmem:[#allocation5 + $0xc] sm:$0xf]
    %v64 = vld [vmem:[#allocation5 + $0x10] sm:$0xf]
    %v65 = vld [vmem:[#allocation5 + $0x14] sm:$0xf]
    %v66 = vld [vmem:[#allocation5 + $0x18] sm:$0xf]
    %v67 = vld [vmem:[#allocation5 + $0x1c] sm:$0xf]
    %v68 = vld [vmem:[#allocation5 + $0x20] sm:$0xf]
    %v69 = vld [vmem:[#allocation5 + $0x24] sm:$0xf]
    %v70 = vld [vmem:[#allocation5 + $0x28] sm:$0xf]
    %v71 = vld [vmem:[#allocation5 + $0x2c] sm:$0xf]
    %v72 = vld [vmem:[#allocation5 + $0x30] sm:$0xf]
    %v73 = vld [vmem:[#allocation5 + $0x34] sm:$0xf]
    %v74 = vld [vmem:[#allocation5 + $0x38] sm:$0xf]
    %v75 = vld [vmem:[#allocation5 + $0x3c] sm:$0xf]
    %v78 = vunpack.c.l.b16 %v58
    %v79 = vunpack.c.l.b16 %v59
    %v80 = vpack.c.b16 %v79, %v78
    %v98 = vunpack.c.l.b16 %v60
    %v99 = vunpack.c.l.b16 %v61
    %v100 = vunpack.c.l.b16 %v62
    %v101 = vunpack.c.l.b16 %v63
    %v102 = vunpack.c.l.b16 %v64
    %v103 = vunpack.c.l.b16 %v65
    %v104 = vunpack.c.l.b16 %v66
    %v105 = vunpack.c.l.b16 %v67
    %v106 = vunpack.c.l.b16 %v68
    %v107 = vunpack.c.l.b16 %v69
    %v108 = vunpack.c.l.b16 %v70
    %v109 = vunpack.c.l.b16 %v71
    %v110 = vunpack.c.l.b16 %v72
    %v111 = vunpack.c.l.b16 %v73
    %v112 = vunpack.c.l.b16 %v74
    %v113 = vunpack.c.l.b16 %v75
    %v114 = vpack.c.b16 %v99, %v98
    %v115 = vpack.c.b16 %v101, %v100
    %v116 = vpack.c.b16 %v103, %v102
    %v117 = vpack.c.b16 %v105, %v104
    %v118 = vpack.c.b16 %v107, %v106
    %v119 = vpack.c.b16 %v109, %v108
    %v120 = vpack.c.b16 %v111, %v110
    %v121 = vpack.c.b16 %v113, %v112
    %130 = vmatprep.subr.bf16.mxu0 0
    %131 = vmatpush1.bf16.msra.mxu0 %v114
    %132 = vmatprep.subr.bf16.mxu0 0
    %133 = vmatpush1.bf16.msra.mxu0 %v115
    %134 = vmatprep.subr.bf16.mxu0 0
    %135 = vmatpush1.bf16.msra.mxu0 %v116
    %136 = vmatprep.subr.bf16.mxu0 0
    %137 = vmatpush1.bf16.msra.mxu0 %v117
    %138 = vmatprep.subr.bf16.mxu0 0
    %139 = vmatpush1.bf16.msra.mxu0 %v118
    %140 = vmatprep.subr.bf16.mxu0 0
    %141 = vmatpush1.bf16.msra.mxu0 %v119
    %142 = vmatprep.subr.bf16.mxu0 0
    %143 = vmatpush1.bf16.msra.mxu0 %v120
    %144 = vmatprep.subr.bf16.mxu0 0
    %145 = vmatpush1.bf16.msra.mxu0 %v121
    %146 = vmatprep.subr.bf16.mxu0 0
    %147 = vmatpush1.bf16.msra.mxu0 0
    %148 = vmatprep.subr.bf16.mxu0 0
    %149 = vmatpush1.bf16.msra.mxu0 0
    %150 = vmatprep.subr.bf16.mxu0 0
    %151 = vmatpush1.bf16.msra.mxu0 0
    %152 = vmatprep.subr.bf16.mxu0 0
    %153 = vmatpush1.bf16.msra.mxu0 0
    %154 = vmatprep.subr.bf16.mxu0 0
    %155 = vmatpush1.bf16.msra.mxu0 0
    %156 = vmatprep.subr.bf16.mxu0 0
    %157 = vmatpush1.bf16.msra.mxu0 0
    %158 = vmatprep.subr.bf16.mxu0 0
    %159 = vmatpush1.bf16.msra.mxu0 0
    %160 = vmatprep.subr.bf16.mxu0 0
    %161 = vmatpush1.bf16.msra.mxu0 0
    %162 = vmatprep.mubr.bf16.mxu0 0
    %163 = vmatmul.mubr.bf16.gmra.mrb[0].mxu0 %v80
    %v164 = vpop.f32.mrb[0].mxu0
    %v165 = vadd.f32 0.0, %v164
    %v166 = vpop.f32.mrb[0].mxu0
    %v167 = vpop.f32.mrb[0].mxu0
    %v168 = vadd.f32 0.0, %v167
    %v169 = vpop.f32.mrb[0].mxu0
    %170 = vdwg.mxu0
    %v171 = vmax.f32 %v165, 0.0
    %v172 = vmax.f32 %v168, 0.0
    %v173 = vlaneseq
    %v174 = vshrl.u32 %v173, 7
    %v175 = vadd.s32 %v174, 8
    %v176 = vstv %s57
    %v177 = vadd.s32 %v174, %v176
    %v178 = vadd.s32 %v175, %v176
    %v179 = vlaneseq
    %v180 = vand.u32 %v179, 127
    %v181 = vmul.u32 %v177, 2654435761
    %v182 = vmul.u32 %v178, 2654435761
    %v183 = vmul.u32 %v180, 2246822519
    %v184 = vxor.u32 %v181, %v183
    %v185 = vxor.u32 %v182, %v183
    %v186 = vxor.u32 %v184, 1
    %v187 = vxor.u32 %v185, 1
    %v188 = vshrl.u32 %v186, 15
    %v189 = vshrl.u32 %v187, 15
    %v190 = vxor.u32 %v186, %v188
    %v191 = vxor.u32 %v187, %v189
    %v192 = vmul.u32 %v190, 739982445
    %v193 = vmul.u32 %v191, 739982445
    %v194 = vshrl.u32 %v192, 12
    %v195 = vshrl.u32 %v193, 12
    %v196 = vxor.u32 %v192, %v194
    %v197 = vxor.u32 %v193, %v195
    %v198 = vmul.u32 %v196, 695872825
    %v199 = vmul.u32 %v197, 695872825
    %v200 = vshrl.u32 %v198, 15
    %v201 = vshrl.u32 %v199, 15
    %v202 = vxor.u32 %v198, %v200
    %v203 = vxor.u32 %v199, %v201
    %v204 = vshrl.u32 %v202, 31
    %v205 = vshrl.u32 %v203, 31
    %vm206 = vcmp.eq.s32.totalorder %v204, 0
    %vm207 = vcmp.eq.s32.totalorder %v205, 0
    %v208 = vmul.f32 %v171, 2.0
    %v209 = vmul.f32 %v172, 2.0
    %v210 = vsel %vm206, %v208, 0.0
    %v211 = vsel %vm207, %v209, 0.0
    %v212 = vpack.c.bf16 %v211, %v210
    %v213 = vld [vmem:[#allocation7] sm:$0xf]
    %v214 = vld [vmem:[#allocation7 + $0x4] sm:$0xf]
    %v215 = vld [vmem:[#allocation7 + $0x8] sm:$0xf]
    %v216 = vld [vmem:[#allocation7 + $0xc] sm:$0xf]
    %v217 = vld [vmem:[#allocation7 + $0x10] sm:$0xf]
    %v218 = vld [vmem:[#allocation7 + $0x14] sm:$0xf]
    %v219 = vld [vmem:[#allocation7 + $0x18] sm:$0xf]
    %v220 = vld [vmem:[#allocation7 + $0x1c] sm:$0xf]
    %v221 = vld [vmem:[#allocation7 + $0x20] sm:$0xf]
    %v222 = vld [vmem:[#allocation7 + $0x24] sm:$0xf]
    %v223 = vld [vmem:[#allocation7 + $0x28] sm:$0xf]
    %v224 = vld [vmem:[#allocation7 + $0x2c] sm:$0xf]
    %v225 = vld [vmem:[#allocation7 + $0x30] sm:$0xf]
    %v226 = vld [vmem:[#allocation7 + $0x34] sm:$0xf]
    %v227 = vld [vmem:[#allocation7 + $0x38] sm:$0xf]
    %v228 = vld [vmem:[#allocation7 + $0x3c] sm:$0xf]
    %v245 = vunpack.c.l.b16 %v213
    %v246 = vunpack.c.l.b16 %v214
    %v247 = vunpack.c.l.b16 %v215
    %v248 = vunpack.c.l.b16 %v216
    %v249 = vunpack.c.l.b16 %v217
    %v250 = vunpack.c.l.b16 %v218
    %v251 = vunpack.c.l.b16 %v219
    %v252 = vunpack.c.l.b16 %v220
    %v253 = vunpack.c.l.b16 %v221
    %v254 = vunpack.c.l.b16 %v222
    %v255 = vunpack.c.l.b16 %v223
    %v256 = vunpack.c.l.b16 %v224
    %v257 = vunpack.c.l.b16 %v225
    %v258 = vunpack.c.l.b16 %v226
    %v259 = vunpack.c.l.b16 %v227
    %v260 = vunpack.c.l.b16 %v228
    %v261 = vpack.c.b16 %v246, %v245
    %v262 = vpack.c.b16 %v248, %v247
    %v263 = vpack.c.b16 %v250, %v249
    %v264 = vpack.c.b16 %v252, %v251
    %v265 = vpack.c.b16 %v254, %v253
    %v266 = vpack.c.b16 %v256, %v255
    %v267 = vpack.c.b16 %v258, %v257
    %v268 = vpack.c.b16 %v260, %v259
    %277 = vmatprep.subr.bf16.mxu0 0
    %278 = vmatpush1.bf16.msra.mxu0 %v261
    %279 = vmatprep.subr.bf16.mxu0 0
    %280 = vmatpush1.bf16.msra.mxu0 %v262
    %281 = vmatprep.subr.bf16.mxu0 0
    %282 = vmatpush1.bf16.msra.mxu0 %v263
    %283 = vmatprep.subr.bf16.mxu0 0
    %284 = vmatpush1.bf16.msra.mxu0 %v264
    %285 = vmatprep.subr.bf16.mxu0 0
    %286 = vmatpush1.bf16.msra.mxu0 %v265
    %287 = vmatprep.subr.bf16.mxu0 0
    %288 = vmatpush1.bf16.msra.mxu0 %v266
    %289 = vmatprep.subr.bf16.mxu0 0
    %290 = vmatpush1.bf16.msra.mxu0 %v267
    %291 = vmatprep.subr.bf16.mxu0 0
    %292 = vmatpush1.bf16.msra.mxu0 %v268
    %293 = vmatprep.subr.bf16.mxu0 0
    %294 = vmatpush1.bf16.msra.mxu0 0
    %295 = vmatprep.subr.bf16.mxu0 0
    %296 = vmatpush1.bf16.msra.mxu0 0
    %297 = vmatprep.subr.bf16.mxu0 0
    %298 = vmatpush1.bf16.msra.mxu0 0
    %299 = vmatprep.subr.bf16.mxu0 0
    %300 = vmatpush1.bf16.msra.mxu0 0
    %301 = vmatprep.subr.bf16.mxu0 0
    %302 = vmatpush1.bf16.msra.mxu0 0
    %303 = vmatprep.subr.bf16.mxu0 0
    %304 = vmatpush1.bf16.msra.mxu0 0
    %305 = vmatprep.subr.bf16.mxu0 0
    %306 = vmatpush1.bf16.msra.mxu0 0
    %307 = vmatprep.subr.bf16.mxu0 0
    %308 = vmatpush1.bf16.msra.mxu0 0
    %309 = vmatprep.mubr.bf16.mxu0 0
    %310 = vmatmul.mubr.bf16.gmra.mrb[0].mxu0 %v212
    %v311 = vpop.f32.mrb[0].mxu0
    %v312 = vadd.f32 0.0, %v311
    %v313 = vpop.f32.mrb[0].mxu0
    %v314 = vpop.f32.mrb[0].mxu0
    %v315 = vadd.f32 0.0, %v314
    %v316 = vpop.f32.mrb[0].mxu0
    %317 = vdwg.mxu0
    %v318 = vmax.f32 %v312, 0.0
    %v319 = vmax.f32 %v315, 0.0
    %v320 = vxor.u32 %v184, 2654435769
    %v321 = vxor.u32 %v185, 2654435769
    %v322 = vshrl.u32 %v320, 15
    %v323 = vshrl.u32 %v321, 15
    %v324 = vxor.u32 %v320, %v322
    %v325 = vxor.u32 %v321, %v323
    %v326 = vmul.u32 %v324, 739982445
    %v327 = vmul.u32 %v325, 739982445
    %v328 = vshrl.u32 %v326, 12
    %v329 = vshrl.u32 %v327, 12
    %v330 = vxor.u32 %v326, %v328
    %v331 = vxor.u32 %v327, %v329
    %v332 = vmul.u32 %v330, 695872825
    %v333 = vmul.u32 %v331, 695872825
    %v334 = vshrl.u32 %v332, 15
    %v335 = vshrl.u32 %v333, 15
    %v336 = vxor.u32 %v332, %v334
    %v337 = vxor.u32 %v333, %v335
    %v338 = vshrl.u32 %v336, 31
    %v339 = vshrl.u32 %v337, 31
    %vm340 = vcmp.eq.s32.totalorder %v338, 0
    %vm341 = vcmp.eq.s32.totalorder %v339, 0
    %v342 = vmul.f32 %v318, 2.0
    %v343 = vmul.f32 %v319, 2.0
    %v344 = vsel %vm340, %v342, 0.0
    %v345 = vsel %vm341, %v343, 0.0
    %346 = vst [vmem:[#allocation8] sm:$0xff] %v344
    %347 = vst [vmem:[#allocation8 + $0x8] sm:$0xff] %v345
    // Predicated region
    $region26: #{tpu_custom_call.1} parent=1 // pred_check
      _
    $region27: #{tpu_custom_call.1} parent=1 // pred_check_branch
      %349 = sbr.rel (0) target = $region29
    $region28: #{tpu_custom_call.1} parent=1 // pred_region
      %s351 = ssub.s32 256, 256
      %352 = vsyncadd [#allocation4], %s351
      %s353 = sshll.u32 [#allocation8], 4
      %s354 = int_to_ptr.vmem [resolvable:$true] %s353
      %359 = dma.vmem_to_hbm [thread:$0]  %s354, 256, %s3, [#allocation4], 128, 128, 8
    $region29: #{tpu_custom_call.1} parent=1 // pred_fallthru
      _
    // Predicated region
    $region30: #{tpu_custom_call.1} parent=1 // pred_check
      _
    $region31: #{tpu_custom_call.1} parent=1 // pred_check_branch
      %361 = sbr.rel (0) target = $region33
    $region32: #{tpu_custom_call.1} parent=1 // pred_region
      %362 = dma.done [#allocation4], 256
    $region33: #{tpu_custom_call.1} parent=1 // pred_fallthru
      _
    %363 = vsyncpa [#allocation3], 1
    %364 = vsyncpa [#allocation6], 1
    %365 = vsyncpa [#allocation4], 1

</llo_original>
